<compile_context>
chip_gen: v7x
topology: tpu7x:2x2x1
jax: 0.10.0
libtpu: 0.0.40
codegen_flags: <defaults>
</compile_context>

<pallas_src>
import functools

import numpy as np
import jax
import jax.numpy as jnp
from jax.experimental import pallas as pl
from jax.experimental.pallas import tpu as pltpu


def _pick_tile(dim: int, target: int, quantum: int) -> int:
    """Largest multiple of `quantum` dividing `dim` that is <= target, else `dim`.

    Pallas requires the last two block dims to be multiples of (8, 128) unless they
    span the full array dim, so tiles are either the full dim or quantum-aligned.
    """
    if dim <= target:
        return dim
    t = (target // quantum) * quantum
    while t >= quantum:
        if dim % t == 0:
            return t
        t -= quantum
    return dim


def _tgc_kernel(x_ref, w_ref, b_ref, o_ref, xpad_ref, acc_ref, *,
                n_nodes, n_frames, k_taps):
    """One (batch, out-channel tile, in-channel tile) grid step.

    x_ref   : (1, tile_c, T*N)           input chunk (original dtype)
    w_ref   : (K, tile_o, tile_c)        per-tap weights (compute dtype)
    b_ref   : (tile_o, 1)                bias, f32
    o_ref   : (1, tile_o, T*N)           output tile
    xpad_ref: (tile_c, (T + K - 1) * N)  time-zero-padded staging scratch (compute dtype)
    acc_ref : (tile_o, T*N)              f32 accumulator, persists across the C axis
    """
    c_idx = pl.program_id(2)
    pad = (k_taps - 1) // 2
    halo = pad * n_nodes
    tn = n_frames * n_nodes

    # Stage (and cast) the input chunk into the temporally zero-padded scratch.
    # Pad lanes are re-zeroed every step (cheap) so there is no cross-step
    # initialization assumption (safe under megacore grid sharding).
    if pad > 0:
        zeros = jnp.zeros((xpad_ref.shape[0], halo), xpad_ref.dtype)
        xpad_ref[:, :halo] = zeros
        xpad_ref[:, halo + tn:halo + tn + halo] = zeros
    xpad_ref[:, halo:halo + tn] = x_ref[0].astype(xpad_ref.dtype)

    @pl.when(c_idx == 0)
    def _init():
        acc_ref[...] = jnp.zeros_like(acc_ref)

    # K accumulating MXU matmuls; tap k reads padded frames [k, k + T).
    for k in range(k_taps):
        acc_ref[...] += jnp.dot(
            w_ref[k], xpad_ref[:, k * n_nodes:k * n_nodes + tn],
            preferred_element_type=jnp.float32)

    @pl.when(c_idx == pl.num_programs(2) - 1)
    def _finalize():
        # Fused bias + ReLU on the f32 accumulator; one lane-dense store.
        o_ref[0] = jnp.maximum(acc_ref[...] + b_ref[...], 0.0).astype(o_ref.dtype)


@functools.partial(jax.jit, static_argnames=("kernel_size", "compute_dtype"))
def temporal_graph_convolution(x_nchw, weight, bias, *, kernel_size,
                               compute_dtype=jnp.bfloat16):
    """Forward pass of TemporalGraphConvolution (module defaults), stride=1.

    x_nchw : (B, C, T, N)   PyTorch NCHW convention
    weight : (O, C, K, 1)   Conv2d weight (O == C for this module)
    bias   : (O,)           Conv2d bias
    returns: (B, O, T, N)
    """
    B, C, T, N = x_nchw.shape
    O = weight.shape[0]
    K = kernel_size
    assert K % 2 == 1, "kernel_size must be odd (same assert as the module)"
    assert weight.shape == (O, C, K, 1)
    assert bias.shape == (O,)
    pad = (K - 1) // 2
    TN = T * N
    halo = pad * N

    # Layout glue (all cheap / contiguous — no padded copy of x in HBM).
    x2 = x_nchw.reshape(B, C, TN)
    # w3[k, o, c] = weight[o, c, k, 0]; cast to the MXU compute dtype (tiny array).
    w3 = jnp.transpose(weight[..., 0], (2, 0, 1)).astype(compute_dtype)
    b2 = bias.reshape(O, 1).astype(jnp.float32)

    # Channel tiles bound per-step VMEM; tile_c is the matmul contraction chunk.
    tile_c = _pick_tile(C, target=128, quantum=128)
    tile_o = _pick_tile(O, target=128, quantum=8)
    grid = (B, O // tile_o, C // tile_c)

    kernel = functools.partial(_tgc_kernel, n_nodes=N, n_frames=T, k_taps=K)

    # Per-step VMEM estimate (double-buffered blocks + scratch); raise the scoped
    # limit only when we exceed the smallest default (16 MiB on v5e).
    comp_bytes = np.dtype(compute_dtype).itemsize
    io_bytes = np.dtype(x_nchw.dtype).itemsize
    est = (2 * tile_c * TN * io_bytes            # x blocks
           + 2 * K * tile_o * tile_c * comp_bytes  # weight blocks
           + 2 * tile_o * 4                        # bias blocks
           + 2 * tile_o * TN * io_bytes            # output blocks
           + tile_o * TN * 4                       # f32 accumulator scratch
           + tile_c * (TN + 2 * halo) * comp_bytes)  # padded staging scratch
    est = int(est * 1.15) + (2 << 20)
    cp_kwargs = dict(dimension_semantics=("parallel", "parallel", "arbitrary"))
    if est > (16 << 20):
        cp_kwargs["vmem_limit_bytes"] = min(est, 96 << 20)

    out = pl.pallas_call(
        kernel,
        out_shape=jax.ShapeDtypeStruct((B, O, TN), x_nchw.dtype),
        grid_spec=pltpu.PrefetchScalarGridSpec(
            num_scalar_prefetch=0,
            grid=grid,
            in_specs=[
                pl.BlockSpec((1, tile_c, TN), lambda b, o, c: (b, c, 0)),
                pl.BlockSpec((K, tile_o, tile_c), lambda b, o, c: (0, o, c)),
                pl.BlockSpec((tile_o, 1), lambda b, o, c: (o, 0)),
            ],
            out_specs=pl.BlockSpec((1, tile_o, TN), lambda b, o, c: (b, o, 0)),
            scratch_shapes=[
                pltpu.VMEM((tile_c, TN + 2 * halo), compute_dtype),
                pltpu.VMEM((tile_o, TN), jnp.float32),
            ],
        ),
        compiler_params=pltpu.CompilerParams(**cp_kwargs),
    )(x2, w3, b2)

    return out.reshape(B, O, T, N)


def _reference(x_nchw, weight, bias, kernel_size, compute_dtype=jnp.float32):
    """Pure-JAX reference: Conv2d((K,1), pad=((K-1)//2, 0)) + bias + ReLU."""
    pad = (kernel_size - 1) // 2
    y = jax.lax.conv_general_dilated(
        x_nchw.astype(compute_dtype), weight.astype(compute_dtype),
        window_strides=(1, 1),
        padding=((pad, pad), (0, 0)),
        dimension_numbers=("NCHW", "OIHW", "NCHW"),
        preferred_element_type=jnp.float32)
    y = y + bias[None, :, None, None].astype(jnp.float32)
    return jnp.maximum(y, 0.0).astype(x_nchw.dtype)


if __name__ == "__main__":
    # Small shapes consistent with the module: in_channels == out_channels == 4
    # (the module's conv requires it), frames=16, nodes=16, batch=2, K=3.
    B, C, T, N = 2, 4, 16, 16
    O, K = C, 3

    key = jax.random.PRNGKey(0)
    kx, kw, kb = jax.random.split(key, 3)
    x = jax.random.normal(kx, (B, C, T, N), dtype=jnp.float32)
    weight = jax.random.normal(kw, (O, C, K, 1), dtype=jnp.float32) * 0.1
    bias = jax.random.normal(kb, (O,), dtype=jnp.float32) * 0.1

    y = temporal_graph_convolution(x, weight, bias, kernel_size=K)
    y = jax.block_until_ready(y)
    assert y.shape == (B, O, T, N)

    # Tight check vs. a reference using the same bf16 operands / f32 accumulation.
    y_ref_bf16 = _reference(x, weight, bias, K, compute_dtype=jnp.bfloat16)
    assert float(jnp.max(jnp.abs(y - y_ref_bf16))) < 2e-3
    # Loose sanity check vs. the pure-f32 reference (bf16 operand rounding only).
    y_ref_f32 = _reference(x, weight, bias, K, compute_dtype=jnp.float32)
    assert float(jnp.max(jnp.abs(y - y_ref_f32))) < 1e-1

    print("KERNEL_OK")
</pallas_src>

<mosaic_0001>
module attributes {stable_mosaic.version = 11 : i64} {
  func.func @_tgc_kernel(%arg0: i32, %arg1: i32, %arg2: i32, %arg3: memref<1x4x256xf32, #tpu.memory_space<vmem>>, %arg4: memref<3x4x4xbf16, #tpu.memory_space<vmem>>, %arg5: memref<4x1xf32, #tpu.memory_space<vmem>>, %arg6: memref<1x4x256xf32, #tpu.memory_space<vmem>>, %arg7: memref<4x288xbf16, #tpu.memory_space<vmem>>, %arg8: memref<4x256xf32, #tpu.memory_space<vmem>>) attributes {dimension_semantics = [#tpu.dimension_semantics<parallel>, #tpu.dimension_semantics<parallel>, #tpu.dimension_semantics<arbitrary>], iteration_bounds = array<i64: 2, 1, 1>, scalar_prefetch = 0 : i64, scratch_operands = 2 : i64, tpu.core_type = #tpu.core_type<tc>, window_params = [{transform_indices = @transform_0, window_bounds = array<i64: 1, 4, 256>}, {transform_indices = @transform_1, window_bounds = array<i64: 3, 4, 4>}, {transform_indices = @transform_2, window_bounds = array<i64: 4, 1>}, {transform_indices = @transform_3, window_bounds = array<i64: 1, 4, 256>}]} {
    %cst = arith.constant 0.000000e+00 : bf16
    %0 = vector.broadcast %cst : bf16 to vector<4x16xbf16>
    %c0 = arith.constant 0 : index
    %c0_0 = arith.constant 0 : index
    %1 = vector.load %arg7[%c0, %c0_0] : memref<4x288xbf16, #tpu.memory_space<vmem>>, vector<4x16xbf16>
    tpu.vector_store %arg7[%c0, %c0_0], %0 {strides = array<i32>} : memref<4x288xbf16, #tpu.memory_space<vmem>>, vector<4x16xbf16>,
    %c0_1 = arith.constant 0 : index
    %c272 = arith.constant 272 : index
    %2 = vector.load %arg7[%c0_1, %c272] : memref<4x288xbf16, #tpu.memory_space<vmem>>, vector<4x16xbf16>
    tpu.vector_store %arg7[%c0_1, %c272], %0 {strides = array<i32>} : memref<4x288xbf16, #tpu.memory_space<vmem>>, vector<4x16xbf16>,
    %c0_2 = arith.constant 0 : index
    %c0_3 = arith.constant 0 : index
    %c0_4 = arith.constant 0 : index
    %3 = vector.load %arg3[%c0_2, %c0_3, %c0_4] : memref<1x4x256xf32, #tpu.memory_space<vmem>>, vector<1x4x256xf32>
    %4 = vector.shape_cast %3 : vector<1x4x256xf32> to vector<4x256xf32>
    %5 = arith.truncf %4 : vector<4x256xf32> to vector<4x256xbf16>
    %c0_5 = arith.constant 0 : index
    %c16 = arith.constant 16 : index
    %6 = vector.load %arg7[%c0_5, %c16] : memref<4x288xbf16, #tpu.memory_space<vmem>>, vector<4x256xbf16>
    tpu.vector_store %arg7[%c0_5, %c16], %5 {strides = array<i32>} : memref<4x288xbf16, #tpu.memory_space<vmem>>, vector<4x256xbf16>,
    %c0_i32 = arith.constant 0 : i32
    %7 = arith.cmpi eq, %arg2, %c0_i32 : i32
    %8 = arith.extui %7 : i1 to i32
    %c0_i32_6 = arith.constant 0 : i32
    %9 = arith.cmpi ne, %8, %c0_i32_6 : i32
    scf.if %9 {
      %cst_36 = arith.constant 0.000000e+00 : f32
      %34 = vector.broadcast %cst_36 : f32 to vector<4x256xf32>
      %c0_37 = arith.constant 0 : index
      %c0_38 = arith.constant 0 : index
      %35 = vector.load %arg8[%c0_37, %c0_38] : memref<4x256xf32, #tpu.memory_space<vmem>>, vector<4x256xf32>
      tpu.vector_store %arg8[%c0_37, %c0_38], %34 {strides = array<i32>} : memref<4x256xf32, #tpu.memory_space<vmem>>, vector<4x256xf32>,
    } else {
    }
    %c0_7 = arith.constant 0 : index
    %c0_8 = arith.constant 0 : index
    %10 = vector.load %arg8[%c0_7, %c0_8] : memref<4x256xf32, #tpu.memory_space<vmem>>, vector<4x256xf32>
    %c0_9 = arith.constant 0 : index
    %c0_10 = arith.constant 0 : index
    %c0_11 = arith.constant 0 : index
    %11 = vector.load %arg4[%c0_9, %c0_10, %c0_11] : memref<3x4x4xbf16, #tpu.memory_space<vmem>>, vector<1x4x4xbf16>
    %12 = vector.shape_cast %11 : vector<1x4x4xbf16> to vector<4x4xbf16>
    %c0_12 = arith.constant 0 : index
    %c0_13 = arith.constant 0 : index
    %13 = vector.load %arg7[%c0_12, %c0_13] : memref<4x288xbf16, #tpu.memory_space<vmem>>, vector<4x256xbf16>
    %cst_14 = arith.constant dense<0.000000e+00> : vector<4x256xf32>
    %14 = tpu.matmul %12, %13, %cst_14 {dimension_numbers = #tpu.dot_dimension_numbers<[1], [0], [0], [1], [0, 0, 1, 1], [], []>} : vector<4x4xbf16>, vector<4x256xbf16>, vector<4x256xf32> -> vector<4x256xf32>
    %15 = arith.addf %10, %14 : vector<4x256xf32>
    %c0_15 = arith.constant 0 : index
    %c0_16 = arith.constant 0 : index
    %16 = vector.load %arg8[%c0_15, %c0_16] : memref<4x256xf32, #tpu.memory_space<vmem>>, vector<4x256xf32>
    tpu.vector_store %arg8[%c0_15, %c0_16], %15 {strides = array<i32>} : memref<4x256xf32, #tpu.memory_space<vmem>>, vector<4x256xf32>,
    %c0_17 = arith.constant 0 : index
    %c0_18 = arith.constant 0 : index
    %17 = vector.load %arg8[%c0_17, %c0_18] : memref<4x256xf32, #tpu.memory_space<vmem>>, vector<4x256xf32>
    %c1 = arith.constant 1 : index
    %c0_19 = arith.constant 0 : index
    %c0_20 = arith.constant 0 : index
    %18 = vector.load %arg4[%c1, %c0_19, %c0_20] : memref<3x4x4xbf16, #tpu.memory_space<vmem>>, vector<1x4x4xbf16>
    %19 = vector.shape_cast %18 : vector<1x4x4xbf16> to vector<4x4xbf16>
    %c0_21 = arith.constant 0 : index
    %c16_22 = arith.constant 16 : index
    %20 = vector.load %arg7[%c0_21, %c16_22] : memref<4x288xbf16, #tpu.memory_space<vmem>>, vector<4x256xbf16>
    %cst_23 = arith.constant dense<0.000000e+00> : vector<4x256xf32>
    %21 = tpu.matmul %19, %20, %cst_23 {dimension_numbers = #tpu.dot_dimension_numbers<[1], [0], [0], [1], [0, 0, 1, 1], [], []>} : vector<4x4xbf16>, vector<4x256xbf16>, vector<4x256xf32> -> vector<4x256xf32>
    %22 = arith.addf %17, %21 : vector<4x256xf32>
    %c0_24 = arith.constant 0 : index
    %c0_25 = arith.constant 0 : index
    %23 = vector.load %arg8[%c0_24, %c0_25] : memref<4x256xf32, #tpu.memory_space<vmem>>, vector<4x256xf32>
    tpu.vector_store %arg8[%c0_24, %c0_25], %22 {strides = array<i32>} : memref<4x256xf32, #tpu.memory_space<vmem>>, vector<4x256xf32>,
    %c0_26 = arith.constant 0 : index
    %c0_27 = arith.constant 0 : index
    %24 = vector.load %arg8[%c0_26, %c0_27] : memref<4x256xf32, #tpu.memory_space<vmem>>, vector<4x256xf32>
    %c2 = arith.constant 2 : index
    %c0_28 = arith.constant 0 : index
    %c0_29 = arith.constant 0 : index
    %25 = vector.load %arg4[%c2, %c0_28, %c0_29] : memref<3x4x4xbf16, #tpu.memory_space<vmem>>, vector<1x4x4xbf16>
    %26 = vector.shape_cast %25 : vector<1x4x4xbf16> to vector<4x4xbf16>
    %c0_30 = arith.constant 0 : index
    %c32 = arith.constant 32 : index
    %27 = vector.load %arg7[%c0_30, %c32] : memref<4x288xbf16, #tpu.memory_space<vmem>>, vector<4x256xbf16>
    %cst_31 = arith.constant dense<0.000000e+00> : vector<4x256xf32>
    %28 = tpu.matmul %26, %27, %cst_31 {dimension_numbers = #tpu.dot_dimension_numbers<[1], [0], [0], [1], [0, 0, 1, 1], [], []>} : vector<4x4xbf16>, vector<4x256xbf16>, vector<4x256xf32> -> vector<4x256xf32>
    %29 = arith.addf %24, %28 : vector<4x256xf32>
    %c0_32 = arith.constant 0 : index
    %c0_33 = arith.constant 0 : index
    %30 = vector.load %arg8[%c0_32, %c0_33] : memref<4x256xf32, #tpu.memory_space<vmem>>, vector<4x256xf32>
    tpu.vector_store %arg8[%c0_32, %c0_33], %29 {strides = array<i32>} : memref<4x256xf32, #tpu.memory_space<vmem>>, vector<4x256xf32>,
    %c0_i32_34 = arith.constant 0 : i32
    %31 = arith.cmpi eq, %arg2, %c0_i32_34 : i32
    %32 = arith.extui %31 : i1 to i32
    %c0_i32_35 = arith.constant 0 : i32
    %33 = arith.cmpi ne, %32, %c0_i32_35 : i32
    scf.if %33 {
      %c0_36 = arith.constant 0 : index
      %c0_37 = arith.constant 0 : index
      %34 = vector.load %arg8[%c0_36, %c0_37] : memref<4x256xf32, #tpu.memory_space<vmem>>, vector<4x256xf32>
      %c0_38 = arith.constant 0 : index
      %c0_39 = arith.constant 0 : index
      %35 = vector.load %arg5[%c0_38, %c0_39] : memref<4x1xf32, #tpu.memory_space<vmem>>, vector<4x1xf32>
      %36 = vector.broadcast %35 : vector<4x1xf32> to vector<4x256xf32>
      %37 = arith.addf %34, %36 : vector<4x256xf32>
      %cst_40 = arith.constant 0.000000e+00 : f32
      %38 = vector.broadcast %cst_40 : f32 to vector<4x256xf32>
      %39 = arith.maximumf %37, %38 : vector<4x256xf32>
      %c0_41 = arith.constant 0 : index
      %c0_42 = arith.constant 0 : index
      %c0_43 = arith.constant 0 : index
      %40 = vector.load %arg6[%c0_41, %c0_42, %c0_43] : memref<1x4x256xf32, #tpu.memory_space<vmem>>, vector<1x4x256xf32>
      %41 = vector.shape_cast %40 : vector<1x4x256xf32> to vector<4x256xf32>
      %42 = vector.shape_cast %39 : vector<4x256xf32> to vector<1x4x256xf32>
      tpu.vector_store %arg6[%c0_41, %c0_42, %c0_43], %42 {strides = array<i32>} : memref<1x4x256xf32, #tpu.memory_space<vmem>>, vector<1x4x256xf32>,
    } else {
    }
    return
  }
  func.func @transform_0(%arg0: i32, %arg1: i32, %arg2: i32) -> (i32, i32, i32) {
    %c0_i32 = arith.constant 0 : i32
    %c0_i32_0 = arith.constant 0 : i32
    return %arg0, %arg2, %c0_i32 : i32, i32, i32
  }
  func.func @transform_1(%arg0: i32, %arg1: i32, %arg2: i32) -> (i32, i32, i32) {
    %c0_i32 = arith.constant 0 : i32
    %c0_i32_0 = arith.constant 0 : i32
    return %c0_i32, %arg1, %arg2 : i32, i32, i32
  }
  func.func @transform_2(%arg0: i32, %arg1: i32, %arg2: i32) -> (i32, i32) {
    %c0_i32 = arith.constant 0 : i32
    %c0_i32_0 = arith.constant 0 : i32
    return %arg1, %c0_i32 : i32, i32
  }
  func.func @transform_3(%arg0: i32, %arg1: i32, %arg2: i32) -> (i32, i32, i32) {
    %c0_i32 = arith.constant 0 : i32
    %c0_i32_0 = arith.constant 0 : i32
    return %arg0, %arg1, %c0_i32 : i32, i32, i32
  }
}

</mosaic_0001>

<llo_original>
// kernel: temporal_graph_convolution.1
$region0: #{temporal_graph_convolution.1}
  #allocation0 [shape = 'u32[]', space=smem, size = 0x4, offset = 0x4, fixed_abs, tag = 'smem constant byte address 0x4 - core index']
  #allocation1 [shape = 'u32[144,128]{1,0:T(1,128)}', space=vmem, size = 0x12000, scoped, tag = 'internal scratch']
  #allocation2 [shape = 'bf16[4,288]{1,0:T(4,128)(2,1)}', space=vmem, size = 0xc00, scoped, tag = 'scratch operand']
  #allocation3 [shape = 'f32[4,256]{1,0:T(4,128)}', space=vmem, size = 0x1000, scoped, tag = 'scratch operand']
  %s0 = inlined_call_operand.vmem [shape: f32[2,4,256], index: 0, kind: input, shape index: {}]
  %s1 = inlined_call_operand.vmem [shape: bf16[3,4,4], index: 1, kind: input, shape index: {}]
  %s2 = inlined_call_operand.vmem [shape: f32[4,1], index: 2, kind: input, shape index: {}]
  %s3 = inlined_call_operand.vmem [shape: f32[2,4,256], index: 3, kind: output, shape index: {}]
  %s4 = sld [smem:[#allocation0]]
  $region53: #{temporal_graph_convolution.1} parent=0
    _
  %s6 = ssub.s32 1, %s4
  %s7 = scalar_select 0, %s6, %s4
  loop: start=0, step=1, limit=4
  $region2: #{temporal_graph_convolution.1} parent=0 // loop_pre_header
    _
  $region3: #{temporal_graph_convolution.1} parent=0 // loop_header
    %s9 = sphi 0, %s13
    %p10 = scmp.ge.s32.totalorder %s9, 4
    %s16 = sphi 0, %s35
    %s17 = sphi 0, %s31
    %s18 = sphi 0, %s27
    %s19 = sphi 0, %s16
    %s20 = sphi 0, %s17
    %s21 = sphi 0, %s18
    %s22 = sphi 0, %s19
    %s23 = sphi 0, %s20
    %s24 = sphi 0, %s21
    %s40 = sphi 0, %s42
    %s43 = sphi 0, %s40
    %s44 = sphi 0, %s43
    %s60 = sphi 0, %s44
    %s68 = sphi 0, %s70
    %s71 = sphi 0, %s68
    %s72 = sphi 0, %s71
    %s88 = sphi 0, %s72
    %s94 = sphi 0, %s96
    %s97 = sphi 0, %s94
    %s98 = sphi 0, %s97
    %s114 = sphi 0, %s98
    %s122 = sphi 0, %s124
    %s125 = sphi 0, %s122
    %s126 = sphi 0, %s125
    %s142 = sphi 0, %s126
  $region4: #{temporal_graph_convolution.1} parent=0 // loop_header_branch
    %12 = sbr.rel (%p10) target = $region8
  $region5: #{temporal_graph_convolution.1} parent=0 // loop_body
    %s14 = ssub.s32 %s9, 1
    %s15 = ssub.s32 %s9, 2
    %s25 = sadd.s32 1, %s18
    %p26 = scmp.ge.s32.totalorder %s25, 1
    %s27 = scalar_select %p26, 0, %s25
    %s28 = sadd.s32 1, %s17
    %s29 = scalar_select %p26, %s28, %s17
    %p30 = scmp.ge.s32.totalorder %s29, 1
    %s31 = scalar_select %p30, 0, %s29
    %s32 = sadd.s32 1, %s16
    %s33 = scalar_select %p30, %s32, %s16
    %p34 = scmp.ge.s32.totalorder %s33, 2
    %s35 = scalar_select %p34, 0, %s33
    %s36 = ssub.s32 %s16, %s35
    %s37 = ssub.s32 %s18, %s27
    %s38 = sor.u32 %s36, %s37
    %p39 = scmp.eq.s32.totalorder %s38, 0
    %s41 = sadd.s32 %s40, 1
    %s42 = scalar_select %p39, %s40, %s41
    %p45 = pneg %p39
    %p46 = scmp.eq.s32.totalorder %s9, 1
    %p47 = por %p45, %p46
    %p48 = scmp.ne.s32.totalorder %s40, %s43
    %p49 = scmp.eq.s32.totalorder %s9, 0
    %p50 = por %p48, %p49
    %p51 = scmp.ne.s32.totalorder %s40, %s43
    %p52 = scmp.eq.s32.totalorder %s14, 1
    %p53 = por %p51, %p52
    %p54 = scmp.ne.s32.totalorder %s43, %s44
    %p55 = scmp.eq.s32.totalorder %s14, 0
    %p56 = por %p54, %p55
    %p57 = scmp.ne.s32.totalorder %s43, %s44
    %p58 = scmp.eq.s32.totalorder %s15, 1
    %p59 = por %p57, %p58
    %p61 = scmp.ne.s32.totalorder %s44, %s60
    %p62 = scmp.eq.s32.totalorder %s15, 0
    %p63 = por %p61, %p62
    %s64 = ssub.s32 %s17, %s31
    %s65 = ssub.s32 %s18, %s27
    %s66 = sor.u32 %s64, %s65
    %p67 = scmp.eq.s32.totalorder %s66, 0
    %s69 = sadd.s32 %s68, 1
    %s70 = scalar_select %p67, %s68, %s69
    %p73 = pneg %p67
    %p74 = scmp.eq.s32.totalorder %s9, 1
    %p75 = por %p73, %p74
    %p76 = scmp.ne.s32.totalorder %s68, %s71
    %p77 = scmp.eq.s32.totalorder %s9, 0
    %p78 = por %p76, %p77
    %p79 = scmp.ne.s32.totalorder %s68, %s71
    %p80 = scmp.eq.s32.totalorder %s14, 1
    %p81 = por %p79, %p80
    %p82 = scmp.ne.s32.totalorder %s71, %s72
    %p83 = scmp.eq.s32.totalorder %s14, 0
    %p84 = por %p82, %p83
    %p85 = scmp.ne.s32.totalorder %s71, %s72
    %p86 = scmp.eq.s32.totalorder %s15, 1
    %p87 = por %p85, %p86
    %p89 = scmp.ne.s32.totalorder %s72, %s88
    %p90 = scmp.eq.s32.totalorder %s15, 0
    %p91 = por %p89, %p90
    %s92 = ssub.s32 %s17, %s31
    %p93 = scmp.eq.s32.totalorder %s92, 0
    %s95 = sadd.s32 %s94, 1
    %s96 = scalar_select %p93, %s94, %s95
    %p99 = pneg %p93
    %p100 = scmp.eq.s32.totalorder %s9, 1
    %p101 = por %p99, %p100
    %p102 = scmp.ne.s32.totalorder %s94, %s97
    %p103 = scmp.eq.s32.totalorder %s9, 0
    %p104 = por %p102, %p103
    %p105 = scmp.ne.s32.totalorder %s94, %s97
    %p106 = scmp.eq.s32.totalorder %s14, 1
    %p107 = por %p105, %p106
    %p108 = scmp.ne.s32.totalorder %s97, %s98
    %p109 = scmp.eq.s32.totalorder %s14, 0
    %p110 = por %p108, %p109
    %p111 = scmp.ne.s32.totalorder %s97, %s98
    %p112 = scmp.eq.s32.totalorder %s15, 1
    %p113 = por %p111, %p112
    %p115 = scmp.ne.s32.totalorder %s98, %s114
    %p116 = scmp.eq.s32.totalorder %s15, 0
    %p117 = por %p115, %p116
    %s118 = ssub.s32 %s16, %s35
    %s119 = ssub.s32 %s17, %s31
    %s120 = sor.u32 %s118, %s119
    %p121 = scmp.eq.s32.totalorder %s120, 0
    %s123 = sadd.s32 %s122, 1
    %s124 = scalar_select %p121, %s122, %s123
    %p127 = pneg %p121
    %p128 = scmp.eq.s32.totalorder %s9, 1
    %p129 = por %p127, %p128
    %p130 = scmp.ne.s32.totalorder %s122, %s125
    %p131 = scmp.eq.s32.totalorder %s9, 0
    %p132 = por %p130, %p131
    %p133 = scmp.ne.s32.totalorder %s122, %s125
    %p134 = scmp.eq.s32.totalorder %s14, 1
    %p135 = por %p133, %p134
    %p136 = scmp.ne.s32.totalorder %s125, %s126
    %p137 = scmp.eq.s32.totalorder %s14, 0
    %p138 = por %p136, %p137
    %p139 = scmp.ne.s32.totalorder %s125, %s126
    %p140 = scmp.eq.s32.totalorder %s15, 1
    %p141 = por %p139, %p140
    %p143 = scmp.ne.s32.totalorder %s126, %s142
    %p144 = scmp.eq.s32.totalorder %s15, 0
    %p145 = por %p143, %p144
    %p146 = scmp.le.s32.totalorder 1, %s9
    %p147 = scmp.lt.s32.totalorder %s9, 3
    %p148 = pnand %p146, %p147
    %p149 = pneg %p148
    // Predicated region
    $region9: #{temporal_graph_convolution.1} parent=5 // pred_check
      _
    $region10: #{temporal_graph_convolution.1} parent=5 // pred_check_branch
      %151 = sbr.rel (%p148) target = $region12
    $region11: #{temporal_graph_convolution.1} parent=5 // pred_region
      %s152 = ssub.s32 %s9, 1
      // Predicated region
      $region13: #{temporal_graph_convolution.1} parent=11 // pred_check
        %p153 = pneg %p84
      $region14: #{temporal_graph_convolution.1} parent=11 // pred_check_branch
        %155 = sbr.rel (%p153) target = $region16
      $region15: #{temporal_graph_convolution.1} parent=11 // pred_region
        %p156 = scmp.lt.s32.totalorder %s20, 0
        %s157 = scalar_select %p156, %s20, 0
        %p158 = scmp.lt.s32.totalorder %s21, 0
        %s159 = scalar_select %p158, %s21, 0
        %s160 = sadd.s32 %s159, %s157
        %s161 = smul.addr %s160, 2
        %s162 = scalar_lea.vmem %s1, %s161
      $region16: #{temporal_graph_convolution.1} parent=11 // pred_fallthru
        _
      // Predicated region
      $region17: #{temporal_graph_convolution.1} parent=11 // pred_check
        %p163 = pneg %p110
      $region18: #{temporal_graph_convolution.1} parent=11 // pred_check_branch
        %165 = sbr.rel (%p163) target = $region20
      $region19: #{temporal_graph_convolution.1} parent=11 // pred_region
        %p166 = scmp.lt.s32.totalorder %s20, 0
        %s167 = scalar_select %p166, %s20, 0
        %s168 = smul.addr %s167, 4
        %s169 = scalar_lea.vmem %s2, %s168
      $region20: #{temporal_graph_convolution.1} parent=11 // pred_fallthru
        _
    $region12: #{temporal_graph_convolution.1} parent=5 // pred_fallthru
      _
    %p170 = scmp.lt.s32.totalorder %s9, 2
    // Predicated region
    $region21: #{temporal_graph_convolution.1} parent=5 // pred_check
      %p171 = pneg %p170
    $region22: #{temporal_graph_convolution.1} parent=5 // pred_check_branch
      %173 = sbr.rel (%p171) target = $region24
    $region23: #{temporal_graph_convolution.1} parent=5 // pred_region
      // Predicated region
      $region25: #{temporal_graph_convolution.1} parent=23 // pred_check
        %p174 = pneg %p50
      $region26: #{temporal_graph_convolution.1} parent=23 // pred_check_branch
        %176 = sbr.rel (%p174) target = $region28
      $region27: #{temporal_graph_convolution.1} parent=23 // pred_region
        %p177 = scmp.lt.s32.totalorder %s16, 1
        %s178 = scalar_select %p177, %s16, 1
        %p179 = scmp.lt.s32.totalorder %s18, 0
        %s180 = scalar_select %p179, %s18, 0
        %s181 = smul.addr %s180, 2
        %s182 = smul.addr %s178, 2
        %s183 = sadd.s32 %s181, %s182
        %s184 = smul.addr %s183, 4
        %s185 = scalar_lea.vmem %s0, %s184
      $region28: #{temporal_graph_convolution.1} parent=23 // pred_fallthru
        _
    $region24: #{temporal_graph_convolution.1} parent=5 // pred_fallthru
      _
    %p186 = scmp.le.s32.totalorder 1, %s9
    %p187 = scmp.lt.s32.totalorder %s9, 3
    %p188 = pnand %p186, %p187
    %p189 = pneg %p188
    // Predicated region
    $region29: #{temporal_graph_convolution.1} parent=5 // pred_check
      _
    $region30: #{temporal_graph_convolution.1} parent=5 // pred_check_branch
      %191 = sbr.rel (%p188) target = $region32
    $region31: #{temporal_graph_convolution.1} parent=5 // pred_region
      %s192 = ssub.s32 %s9, 1
      %p193 = scmp.lt.s32.totalorder %s19, 1
      %s194 = scalar_select %p193, %s19, 1
      %p195 = scmp.lt.s32.totalorder %s21, 0
      %s196 = scalar_select %p195, %s21, 0
      %s197 = smul.addr %s196, 2
      %s198 = smul.addr %s194, 2
      %s199 = sadd.s32 %s197, %s198
      %s200 = smul.addr %s199, 4
      %s201 = scalar_lea.vmem %s0, %s200
      %p202 = pneg %p56
      %p203 = pneg %p53
      %p204 = scmp.lt.s32.totalorder %s20, 0
      %s205 = scalar_select %p204, %s20, 0
      %p206 = scmp.lt.s32.totalorder %s21, 0
      %s207 = scalar_select %p206, %s21, 0
      %s208 = sadd.s32 %s207, %s205
      %s209 = smul.addr %s208, 2
      %s210 = scalar_lea.vmem %s1, %s209
      %p211 = pneg %p84
      %p212 = pneg %p81
      %p213 = scmp.lt.s32.totalorder %s20, 0
      %s214 = scalar_select %p213, %s20, 0
      %s215 = smul.addr %s214, 4
      %s216 = scalar_lea.vmem %s2, %s215
      %p217 = pneg %p110
      %p218 = pneg %p107
      %p219 = pneg %p138
      %p220 = pneg %p135
      %p221 = scmp.lt.s32.totalorder %s19, 1
      %s222 = scalar_select %p221, %s19, 1
      %p223 = scmp.lt.s32.totalorder %s20, 0
      %s224 = scalar_select %p223, %s20, 0
      %s225 = smul.addr %s224, 2
      %s226 = smul.addr %s222, 2
      %s227 = sadd.s32 %s225, %s226
      %s228 = smul.addr %s227, 4
      %s229 = scalar_lea.vmem %s3, %s228
      %p230 = scmp.lt.s32.totalorder %s19, 1
      %s231 = scalar_select %p230, %s19, 1
      %p232 = scmp.lt.s32.totalorder %s21, 0
      %s233 = scalar_select %p232, %s21, 0
      %s234 = smul.addr %s233, 2
      %s235 = smul.addr %s231, 2
      %s236 = sadd.s32 %s234, %s235
      %s237 = smul.addr %s236, 4
      %s238 = scalar_lea.vmem %s0, %s237
      %p239 = scmp.lt.s32.totalorder %s20, 0
      %s240 = scalar_select %p239, %s20, 0
      %p241 = scmp.lt.s32.totalorder %s21, 0
      %s242 = scalar_select %p241, %s21, 0
      %s243 = sadd.s32 %s242, %s240
      %s244 = smul.addr %s243, 2
      %s245 = scalar_lea.vmem %s1, %s244
      %p246 = scmp.lt.s32.totalorder %s20, 0
      %s247 = scalar_select %p246, %s20, 0
      %s248 = smul.addr %s247, 4
      %s249 = scalar_lea.vmem %s2, %s248
      %p250 = scmp.lt.s32.totalorder %s19, 1
      %s251 = scalar_select %p250, %s19, 1
      %p252 = scmp.lt.s32.totalorder %s20, 0
      %s253 = scalar_select %p252, %s20, 0
      %s254 = smul.addr %s253, 2
      %s255 = smul.addr %s251, 2
      %s256 = sadd.s32 %s254, %s255
      %s257 = smul.addr %s256, 4
      %s258 = scalar_lea.vmem %s3, %s257
      %vm260 = vcmask 123904
      %261 = vst.msk [vmem:[#allocation2] sm:$0x3] %vm260, 0
      %vm262 = vcmask 255104
      %263 = vst.msk [vmem:[#allocation2 + $0x4] sm:$0x3] %vm262, 0
      %v264 = vld [vmem:[%s238] sm:$0xff]
      %v266 = vcombine.high %v264, %v264
      %v268 = vpack.c.bf16 %v264, %v264
      %v269 = vpack.c.bf16 %v266, %v266
      %v272 = vcombine.low %v268, %v269
      %v274 = vunpack.c.l.s4 1983009808
      %v275 = vunpack.c.0.s8 %v274
      %v276 = vlaneseq
      %v277 = vshrl.u32 %v276, 7
      %v278 = vsub.s32 %v275, %v277
      %v279 = vrot.slane %v272, %v278
      %280 = vrot.lane.b32.xlu0 %v279, 16
      %v281 = vpop.permute.xlu0 %280
      %v282 = vrot.slane %v281, 6
      %vm283 = vcmask 130048
      %v284 = vsel %vm283, %v282, %v281
      %vm286 = vcmask 1041536
      %vm287 = vcmask 1043458
      %vm288 = vmor %vm287, %vm286
      %vm289 = vcmask 128004
      %vm290 = vmor %vm289, %vm288
      %291 = vst.msk [vmem:[#allocation2] sm:$0x3f] %vm290, %v284
      %p292 = scmp.eq.s32.totalorder %s21, 0
      // Predicated region
      $region33: #{temporal_graph_convolution.1} parent=31 // pred_check
        %p293 = pneg %p292
      $region34: #{temporal_graph_convolution.1} parent=31 // pred_check_branch
        %295 = sbr.rel (%p293) target = $region36
      $region35: #{temporal_graph_convolution.1} parent=31 // pred_region
        %296 = vst [vmem:[#allocation3] sm:$0xff] 0.0
      $region36: #{temporal_graph_convolution.1} parent=31 // pred_fallthru
        _
      %v297 = vld [vmem:[#allocation3] sm:$0xff]
      %v298 = vld [vmem:[%s245] sm:$0x3]
      %v299 = vld [vmem:[#allocation2] sm:$0xf]
      %v302 = vunpack.c.l.s4 1983009808
      %v303 = vunpack.c.0.s8 %v302
      %v304 = vlaneseq
      %v305 = vshrl.u32 %v304, 7
      %v306 = vsub.s32 %v303, %v305
      %v307 = vrot.slane %v299, %v306
      %v308 = vcombine.high %v307, %v307
      %vm309 = vcmask 31744
      %v311 = vsel %vm309, %v298, 0
      %vm313 = vcmask 1041408
      %v315 = vsel %vm313, %v307, 0
      %v318 = vsel %vm313, %v308, 0
      %320 = vmatprep.subr.bf16.mxu0 %v318
      %321 = vmatpush1.bf16.msra.mxu0 %v315
      %322 = vmatprep.subr.bf16.mxu0 0
      %323 = vmatpush1.bf16.msra.mxu0 0
      %324 = vmatprep.subr.bf16.mxu0 0
      %325 = vmatpush1.bf16.msra.mxu0 0
      %326 = vmatprep.subr.bf16.mxu0 0
      %327 = vmatpush1.bf16.msra.mxu0 0
      %328 = vmatprep.subr.bf16.mxu0 0
      %329 = vmatpush1.bf16.msra.mxu0 0
      %330 = vmatprep.subr.bf16.mxu0 0
      %331 = vmatpush1.bf16.msra.mxu0 0
      %332 = vmatprep.subr.bf16.mxu0 0
      %333 = vmatpush1.bf16.msra.mxu0 0
      %334 = vmatprep.subr.bf16.mxu0 0
      %335 = vmatpush1.bf16.msra.mxu0 0
      %336 = vmatprep.subr.bf16.mxu0 0
      %337 = vmatpush1.bf16.msra.mxu0 0
      %338 = vmatprep.subr.bf16.mxu0 0
      %339 = vmatpush1.bf16.msra.mxu0 0
      %340 = vmatprep.subr.bf16.mxu0 0
      %341 = vmatpush1.bf16.msra.mxu0 0
      %342 = vmatprep.subr.bf16.mxu0 0
      %343 = vmatpush1.bf16.msra.mxu0 0
      %344 = vmatprep.subr.bf16.mxu0 0
      %345 = vmatpush1.bf16.msra.mxu0 0
      %346 = vmatprep.subr.bf16.mxu0 0
      %347 = vmatpush1.bf16.msra.mxu0 0
      %348 = vmatprep.subr.bf16.mxu0 0
      %349 = vmatpush1.bf16.msra.mxu0 0
      %350 = vmatprep.subr.bf16.mxu0 0
      %351 = vmatpush1.bf16.msra.mxu0 0
      %352 = vmatprep.mubr.bf16.mxu0 0
      %353 = vmatmul.mubr.bf16.gmra.mrb[0].mxu0 %v311
      %v354 = vpop.f32.mrb[0].mxu0
      %v355 = vadd.f32 0.0, %v354
      %v356 = vpop.f32.mrb[0].mxu0
      %v357 = vadd.f32 0.0, %v356
      %v358 = vpop.f32.mrb[0].mxu0
      %v359 = vpop.f32.mrb[0].mxu0
      %360 = vdwg.mxu0
      %v363 = vcombine.low %v355, %v357
      %v365 = vadd.f32 %v297, %v363
      %366 = vst [vmem:[#allocation3] sm:$0xff] %v365
      %v367 = vld [vmem:[#allocation3] sm:$0xff]
      %s368 = scalar_lea.vmem %s245, 2
      %v369 = vld [vmem:[%s368] sm:$0x3]
      %v370 = vld [vmem:[#allocation2] sm:$0x3f]
      %v372 = vcombine.high %v370, %v370
      %v374 = vunpack.c.l.s4 1983009808
      %v375 = vunpack.c.0.s8 %v374
      %v376 = vlaneseq
      %v377 = vshrl.u32 %v376, 7
      %v378 = vsub.s32 %v375, %v377
      %v379 = vrot.slane %v370, %v378
      %v381 = vunpack.c.l.s4 1983009808
      %v382 = vunpack.c.0.s8 %v381
      %v383 = vlaneseq
      %v384 = vshrl.u32 %v383, 7
      %v385 = vsub.s32 %v382, %v384
      %v386 = vrot.slane %v372, %v385
      %v387 = vcombine.high %v379, %v379
      %388 = vrot.lane.b32.xlu0 %v379, 112
      %v389 = vpop.permute.xlu0 %388
      %390 = vrot.lane.b32.xlu0 %v387, 112
      %v391 = vpop.permute.xlu0 %390
      %392 = vrot.lane.b32.xlu0 %v386, 112
      %v393 = vpop.permute.xlu0 %392
      %vm394 = vcmask 916480
      %v395 = vsel %vm394, %v389, %v391
      %v396 = vsel %vm394, %v391, %v393
      %v398 = vsel %vm309, %v369, 0
      %v401 = vsel %vm313, %v395, 0
      %v404 = vsel %vm313, %v396, 0
      %406 = vmatprep.subr.bf16.mxu0 %v404
      %407 = vmatpush1.bf16.msra.mxu0 %v401
      %408 = vmatprep.subr.bf16.mxu0 0
      %409 = vmatpush1.bf16.msra.mxu0 0
      %410 = vmatprep.subr.bf16.mxu0 0
      %411 = vmatpush1.bf16.msra.mxu0 0
      %412 = vmatprep.subr.bf16.mxu0 0
      %413 = vmatpush1.bf16.msra.mxu0 0
      %414 = vmatprep.subr.bf16.mxu0 0
      %415 = vmatpush1.bf16.msra.mxu0 0
      %416 = vmatprep.subr.bf16.mxu0 0
      %417 = vmatpush1.bf16.msra.mxu0 0
      %418 = vmatprep.subr.bf16.mxu0 0
      %419 = vmatpush1.bf16.msra.mxu0 0
      %420 = vmatprep.subr.bf16.mxu0 0
      %421 = vmatpush1.bf16.msra.mxu0 0
      %422 = vmatprep.subr.bf16.mxu0 0
      %423 = vmatpush1.bf16.msra.mxu0 0
      %424 = vmatprep.subr.bf16.mxu0 0
      %425 = vmatpush1.bf16.msra.mxu0 0
      %426 = vmatprep.subr.bf16.mxu0 0
      %427 = vmatpush1.bf16.msra.mxu0 0
      %428 = vmatprep.subr.bf16.mxu0 0
      %429 = vmatpush1.bf16.msra.mxu0 0
      %430 = vmatprep.subr.bf16.mxu0 0
      %431 = vmatpush1.bf16.msra.mxu0 0
      %432 = vmatprep.subr.bf16.mxu0 0
      %433 = vmatpush1.bf16.msra.mxu0 0
      %434 = vmatprep.subr.bf16.mxu0 0
      %435 = vmatpush1.bf16.msra.mxu0 0
      %436 = vmatprep.subr.bf16.mxu0 0
      %437 = vmatpush1.bf16.msra.mxu0 0
      %438 = vmatprep.mubr.bf16.mxu0 0
      %439 = vmatmul.mubr.bf16.gmra.mrb[0].mxu0 %v398
      %v440 = vpop.f32.mrb[0].mxu0
      %v441 = vadd.f32 0.0, %v440
      %v442 = vpop.f32.mrb[0].mxu0
      %v443 = vadd.f32 0.0, %v442
      %v444 = vpop.f32.mrb[0].mxu0
      %v445 = vpop.f32.mrb[0].mxu0
      %446 = vdwg.mxu0
      %v449 = vcombine.low %v441, %v443
      %v451 = vadd.f32 %v367, %v449
      %452 = vst [vmem:[#allocation3] sm:$0xff] %v451
      %v453 = vld [vmem:[#allocation3] sm:$0xff]
      %s454 = scalar_lea.vmem %s245, 4
      %v455 = vld [vmem:[%s454] sm:$0x3]
      %v456 = vld [vmem:[#allocation2] sm:$0x3f]
      %v458 = vcombine.high %v456, %v456
      %v460 = vunpack.c.l.s4 1983009808
      %v461 = vunpack.c.0.s8 %v460
      %v462 = vlaneseq
      %v463 = vshrl.u32 %v462, 7
      %v464 = vsub.s32 %v461, %v463
      %v465 = vrot.slane %v456, %v464
      %v467 = vunpack.c.l.s4 1983009808
      %v468 = vunpack.c.0.s8 %v467
      %v469 = vlaneseq
      %v470 = vshrl.u32 %v469, 7
      %v471 = vsub.s32 %v468, %v470
      %v472 = vrot.slane %v458, %v471
      %v473 = vcombine.high %v465, %v465
      %474 = vrot.lane.b32.xlu0 %v465, 96
      %v475 = vpop.permute.xlu0 %474
      %476 = vrot.lane.b32.xlu0 %v473, 96
      %v477 = vpop.permute.xlu0 %476
      %478 = vrot.lane.b32.xlu0 %v472, 96
      %v479 = vpop.permute.xlu0 %478
      %vm480 = vcmask 785408
      %v481 = vsel %vm480, %v475, %v477
      %v482 = vsel %vm480, %v477, %v479
      %v484 = vsel %vm309, %v455, 0
      %v487 = vsel %vm313, %v481, 0
      %v490 = vsel %vm313, %v482, 0
      %492 = vmatprep.subr.bf16.mxu0 %v490
      %493 = vmatpush1.bf16.msra.mxu0 %v487
      %494 = vmatprep.subr.bf16.mxu0 0
      %495 = vmatpush1.bf16.msra.mxu0 0
      %496 = vmatprep.subr.bf16.mxu0 0
      %497 = vmatpush1.bf16.msra.mxu0 0
      %498 = vmatprep.subr.bf16.mxu0 0
      %499 = vmatpush1.bf16.msra.mxu0 0
      %500 = vmatprep.subr.bf16.mxu0 0
      %501 = vmatpush1.bf16.msra.mxu0 0
      %502 = vmatprep.subr.bf16.mxu0 0
      %503 = vmatpush1.bf16.msra.mxu0 0
      %504 = vmatprep.subr.bf16.mxu0 0
      %505 = vmatpush1.bf16.msra.mxu0 0
      %506 = vmatprep.subr.bf16.mxu0 0
      %507 = vmatpush1.bf16.msra.mxu0 0
      %508 = vmatprep.subr.bf16.mxu0 0
      %509 = vmatpush1.bf16.msra.mxu0 0
      %510 = vmatprep.subr.bf16.mxu0 0
      %511 = vmatpush1.bf16.msra.mxu0 0
      %512 = vmatprep.subr.bf16.mxu0 0
      %513 = vmatpush1.bf16.msra.mxu0 0
      %514 = vmatprep.subr.bf16.mxu0 0
      %515 = vmatpush1.bf16.msra.mxu0 0
      %516 = vmatprep.subr.bf16.mxu0 0
      %517 = vmatpush1.bf16.msra.mxu0 0
      %518 = vmatprep.subr.bf16.mxu0 0
      %519 = vmatpush1.bf16.msra.mxu0 0
      %520 = vmatprep.subr.bf16.mxu0 0
      %521 = vmatpush1.bf16.msra.mxu0 0
      %522 = vmatprep.subr.bf16.mxu0 0
      %523 = vmatpush1.bf16.msra.mxu0 0
      %524 = vmatprep.mubr.bf16.mxu0 0
      %525 = vmatmul.mubr.bf16.gmra.mrb[0].mxu0 %v484
      %v526 = vpop.f32.mrb[0].mxu0
      %v527 = vadd.f32 0.0, %v526
      %v528 = vpop.f32.mrb[0].mxu0
      %v529 = vadd.f32 0.0, %v528
      %v530 = vpop.f32.mrb[0].mxu0
      %v531 = vpop.f32.mrb[0].mxu0
      %532 = vdwg.mxu0
      %v535 = vcombine.low %v527, %v529
      %v537 = vadd.f32 %v453, %v535
      %538 = vst [vmem:[#allocation3] sm:$0xff] %v537
      // Predicated region
      $region37: #{temporal_graph_convolution.1} parent=31 // pred_check
        %p539 = pneg %p292
      $region38: #{temporal_graph_convolution.1} parent=31 // pred_check_branch
        %541 = sbr.rel (%p539) target = $region40
      $region39: #{temporal_graph_convolution.1} parent=31 // pred_region
        %v542 = vld [vmem:[#allocation3] sm:$0xff]
        %v543 = vld [vmem:[%s249] sm:$0xf]
        %545 = vset.pattern.permute.xlu0 0
        %546 = vperm.xlu0 %545, %v543
        %v547 = vpop.permute.xlu0 %546
        %v549 = vunpack.c.l.s4 839922192
        %v550 = vunpack.c.0.s8 %v549
        %v551 = vlaneseq
        %v552 = vshrl.u32 %v551, 7
        %v553 = vsub.s32 %v550, %v552
        %v554 = vrot.slane %v547, %v553
        %v556 = vadd.f32 %v542, %v554
        %v557 = vmax.f32 %v556, 0.0
        %558 = vst [vmem:[%s258] sm:$0xff] %v557
      $region40: #{temporal_graph_convolution.1} parent=31 // pred_fallthru
        _
      %p559 = scmp.lt.s32.totalorder %s19, 1
      %s560 = scalar_select %p559, %s19, 1
      %p561 = scmp.lt.s32.totalorder %s20, 0
      %s562 = scalar_select %p561, %s20, 0
      %s563 = smul.addr %s562, 2
      %s564 = smul.addr %s560, 2
      %s565 = sadd.s32 %s563, %s564
      %s566 = smul.addr %s565, 4
      %s567 = scalar_lea.vmem %s3, %s566
      // Predicated region
      $region41: #{temporal_graph_convolution.1} parent=31 // pred_check
        %p568 = pneg %p135
      $region42: #{temporal_graph_convolution.1} parent=31 // pred_check_branch
        %570 = sbr.rel (%p568) target = $region44
      $region43: #{temporal_graph_convolution.1} parent=31 // pred_region
        _
      $region44: #{temporal_graph_convolution.1} parent=31 // pred_fallthru
        _
    $region32: #{temporal_graph_convolution.1} parent=5 // pred_fallthru
      _
    %p571 = scmp.le.s32.totalorder 2, %s9
    // Predicated region
    $region45: #{temporal_graph_convolution.1} parent=5 // pred_check
      %p572 = pneg %p571
    $region46: #{temporal_graph_convolution.1} parent=5 // pred_check_branch
      %574 = sbr.rel (%p572) target = $region48
    $region47: #{temporal_graph_convolution.1} parent=5 // pred_region
      %s575 = ssub.s32 %s9, 2
      // Predicated region
      $region49: #{temporal_graph_convolution.1} parent=47 // pred_check
        %p576 = pneg %p141
      $region50: #{temporal_graph_convolution.1} parent=47 // pred_check_branch
        %578 = sbr.rel (%p576) target = $region52
      $region51: #{temporal_graph_convolution.1} parent=47 // pred_region
        %p579 = scmp.lt.s32.totalorder %s22, 1
        %s580 = scalar_select %p579, %s22, 1
        %p581 = scmp.lt.s32.totalorder %s23, 0
        %s582 = scalar_select %p581, %s23, 0
        %s583 = smul.addr %s582, 2
        %s584 = smul.addr %s580, 2
        %s585 = sadd.s32 %s583, %s584
        %s586 = smul.addr %s585, 4
        %s587 = scalar_lea.vmem %s3, %s586
      $region52: #{temporal_graph_convolution.1} parent=47 // pred_fallthru
        _
    $region48: #{temporal_graph_convolution.1} parent=5 // pred_fallthru
      _
  $region6: #{temporal_graph_convolution.1} parent=0 // loop_footer
    %s13 = sadd.s32 1, %s9
  $region7: #{temporal_graph_convolution.1} parent=0 // loop_footer_branch
    %8 = sbr.rel target = $region3
  $region8: #{temporal_graph_convolution.1} parent=0 // loop_exit
    _

</llo_original>
